<compile_context>
chip_gen: v7x
topology: tpu7x:2x2x1
jax: 0.10.0
libtpu: 0.0.40
codegen_flags: <defaults>
</compile_context>

<pallas_src>
import functools

import jax
import jax.numpy as jnp
from jax import lax
from jax.experimental import pallas as pl
from jax.experimental.pallas import tpu as pltpu


_VMEM_BLOCK_BUDGET = 32 * 1024 * 1024   # live-block budget used for tile sizing
_VMEM_LIMIT_BYTES = 48 * 1024 * 1024    # scoped VMEM limit (safe on v5e/v6e/v7x)
_LANE_TARGET = 2048                     # mem-bound scaling flattens past ~512-1024 lanes


def _prenorm_layernorm_kernel(x_ref, g_ref, o_ref, *, eps):
    # x_ref: (Bt, C, thw), g_ref: (1, C, 1), o_ref: (Bt, C, thw)
    xf = x_ref[...].astype(jnp.float32)
    g = g_ref[...].astype(jnp.float32)

    # Two-pass centered variance (numerically safer than E[x^2]-E[x]^2).
    mean = jnp.mean(xf, axis=1, keepdims=True)          # sublane (XLU) reduce over C
    xc = xf - mean
    var = jnp.mean(xc * xc, axis=1, keepdims=True)      # torch.var(..., unbiased=False)
    inv = lax.rsqrt(var + eps)                          # EUP transcendental
    o_ref[...] = (xc * inv * g).astype(o_ref.dtype)


def _choose_tiling(b, c, hw, itemsize,
                   *, lane_target=_LANE_TARGET, budget_bytes=_VMEM_BLOCK_BUDGET):
    """Pick (bt, thw, n_hw) for blocks of shape (bt, c, thw).

    VMEM model per block element: 2x double-buffered input + 2x double-buffered
    output (same dtype) + ~3 f32 temporaries materialized by the kernel body.
    """
    bytes_per_elem = 4 * itemsize + 3 * 4
    bytes_per_lane = c * bytes_per_elem

    # --- spatial tile ---
    max_thw_budget = max(128, (budget_bytes // bytes_per_lane) // 128 * 128)
    cap = min(lane_target, max_thw_budget)
    if hw <= cap:
        thw = hw                                    # single spatial tile, full extent
    else:
        thw = cap                                   # 128-multiple tile
        # Prefer an exact divisor so every store stays lane-dense & unmasked.
        for t in range(cap, 127, -128):
            if hw % t == 0:
                thw = t
                break
        # Otherwise keep the 128-multiple tile; Pallas masks the ragged last tile.
    n_hw = pl.cdiv(hw, thw)

    # --- batch packing for small blocks ---
    bt = 1
    block_bytes = c * thw * bytes_per_elem
    payload_bytes = c * thw * itemsize
    if b > 1 and payload_bytes < (1 << 20):
        # Keep >= 2 grid steps for megacore when the hw axis offers none.
        d_max = b if n_hw >= 2 else max(1, b // 2)
        for d in range(d_max, 0, -1):
            if b % d == 0 and d * block_bytes <= budget_bytes:
                bt = d
                break
    return bt, thw, n_hw


def pre_norm(x, g, fn=None):
    """PreNorm forward.

    x:  (B, C, H, W) float array.
    g:  LayerNorm gain holding C elements (e.g. shape (1, C, 1, 1)).
    fn: optional JAX callable applied to the normalized output (the wrapped
        module of PreNorm). None -> identity.
    """
    b, c, h, w = x.shape
    hw = h * w
    eps = 1e-5 if x.dtype == jnp.float32 else 1e-3

    itemsize = jnp.dtype(x.dtype).itemsize
    bt, thw, n_hw = _choose_tiling(b, c, hw, itemsize)
    n_b = b // bt

    x3 = x.reshape(b, c, hw)                 # free view of contiguous NCHW
    g3 = jnp.asarray(g, x.dtype).reshape(1, c, 1)

    normed = pl.pallas_call(
        functools.partial(_prenorm_layernorm_kernel, eps=eps),
        out_shape=jax.ShapeDtypeStruct((b, c, hw), x.dtype),
        grid_spec=pltpu.PrefetchScalarGridSpec(
            num_scalar_prefetch=0,
            grid=(n_b, n_hw),
            in_specs=[
                pl.BlockSpec((bt, c, thw), lambda i, j: (i, 0, j)),
                pl.BlockSpec((1, c, 1), lambda i, j: (0, 0, 0)),
            ],
            out_specs=pl.BlockSpec((bt, c, thw), lambda i, j: (i, 0, j)),
        ),
        compiler_params=pltpu.CompilerParams(
            dimension_semantics=("parallel", "parallel"),
            vmem_limit_bytes=_VMEM_LIMIT_BYTES,
        ),
    )(x3, g3)

    normed = normed.reshape(b, c, h, w)

    # TODO(synk): `fn` is the arbitrary wrapped module (attention / conv block)
    # of PreNorm and has no generic Pallas equivalent; it is applied as a plain
    # JAX callable after the normalization kernel.
    # TODO(synk): for training, wrap pre_norm in jax.custom_vjp (pallas_call has
    # no autodiff rule); this script only covers the forward pass.
    return normed if fn is None else fn(normed)


if __name__ == "__main__":
    key = jax.random.PRNGKey(0)
    k_x, k_g = jax.random.split(key)

    batch, channels, spatial = 2, 4, 16
    x = jax.random.normal(k_x, (batch, channels, spatial, spatial), dtype=jnp.float32)
    # LayerNorm gain parameter (torch init is ones; randomize to exercise the multiply).
    g = 1.0 + 0.1 * jax.random.normal(k_g, (1, channels, 1, 1), dtype=jnp.float32)

    out = pre_norm(x, g, fn=None)   # fn = identity for the self-test
    out = jax.block_until_ready(out)

    # Reference in plain JAX (matches the PyTorch LayerNorm forward exactly).
    mean_ref = jnp.mean(x, axis=1, keepdims=True)
    var_ref = jnp.mean((x - mean_ref) ** 2, axis=1, keepdims=True)   # unbiased=False
    ref = (x - mean_ref) * lax.rsqrt(var_ref + 1e-5) * g

    assert out.shape == x.shape
    assert jnp.allclose(out, ref, atol=1e-5, rtol=1e-5)

    print("KERNEL_OK")
</pallas_src>

<mosaic_0001>
module attributes {stable_mosaic.version = 11 : i64} {
  func.func @_prenorm_layernorm_kernel(%arg0: i32, %arg1: i32, %arg2: memref<1x4x256xf32, #tpu.memory_space<vmem>>, %arg3: memref<1x4x1xf32, #tpu.memory_space<vmem>>, %arg4: memref<1x4x256xf32, #tpu.memory_space<vmem>>) attributes {dimension_semantics = [#tpu.dimension_semantics<parallel>, #tpu.dimension_semantics<parallel>], iteration_bounds = array<i64: 2, 1>, scalar_prefetch = 0 : i64, scratch_operands = 0 : i64, tpu.core_type = #tpu.core_type<tc>, window_params = [{transform_indices = @transform_0, window_bounds = array<i64: 1, 4, 256>}, {pipeline_mode = #tpu.pipeline_mode<synchronous>, transform_indices = @transform_1, window_bounds = array<i64: 1, 4, 1>}, {transform_indices = @transform_2, window_bounds = array<i64: 1, 4, 256>}]} {
    %c0 = arith.constant 0 : index
    %c0_0 = arith.constant 0 : index
    %c0_1 = arith.constant 0 : index
    %0 = vector.load %arg2[%c0, %c0_0, %c0_1] : memref<1x4x256xf32, #tpu.memory_space<vmem>>, vector<1x4x256xf32>
    %c0_2 = arith.constant 0 : index
    %c0_3 = arith.constant 0 : index
    %c0_4 = arith.constant 0 : index
    %1 = vector.load %arg3[%c0_2, %c0_3, %c0_4] : memref<1x4x1xf32, #tpu.memory_space<vmem>>, vector<1x4x1xf32>
    %cst = arith.constant dense<0.000000e+00> : vector<1x256xf32>
    %2 = vector.multi_reduction <add>, %0, %cst [1] : vector<1x4x256xf32> to vector<1x256xf32>
    %3 = vector.shape_cast %2 : vector<1x256xf32> to vector<1x1x256xf32>
    %cst_5 = arith.constant 4.000000e+00 : f32
    %4 = vector.broadcast %cst_5 : f32 to vector<1x1x256xf32>
    %5 = arith.divf %3, %4 : vector<1x1x256xf32>
    %6 = vector.broadcast %5 : vector<1x1x256xf32> to vector<1x4x256xf32>
    %7 = arith.subf %0, %6 : vector<1x4x256xf32>
    %8 = arith.mulf %7, %7 : vector<1x4x256xf32>
    %cst_6 = arith.constant dense<0.000000e+00> : vector<1x256xf32>
    %9 = vector.multi_reduction <add>, %8, %cst_6 [1] : vector<1x4x256xf32> to vector<1x256xf32>
    %10 = vector.shape_cast %9 : vector<1x256xf32> to vector<1x1x256xf32>
    %cst_7 = arith.constant 4.000000e+00 : f32
    %11 = vector.broadcast %cst_7 : f32 to vector<1x1x256xf32>
    %12 = arith.divf %10, %11 : vector<1x1x256xf32>
    %cst_8 = arith.constant 9.99999974E-6 : f32
    %13 = vector.broadcast %cst_8 : f32 to vector<1x1x256xf32>
    %14 = arith.addf %12, %13 : vector<1x1x256xf32>
    %15 = math.rsqrt %14 : vector<1x1x256xf32>
    %16 = vector.broadcast %15 : vector<1x1x256xf32> to vector<1x4x256xf32>
    %17 = arith.mulf %7, %16 : vector<1x4x256xf32>
    %18 = vector.broadcast %1 : vector<1x4x1xf32> to vector<1x4x256xf32>
    %19 = arith.mulf %17, %18 : vector<1x4x256xf32>
    %c0_9 = arith.constant 0 : index
    %c0_10 = arith.constant 0 : index
    %c0_11 = arith.constant 0 : index
    %20 = vector.load %arg4[%c0_9, %c0_10, %c0_11] : memref<1x4x256xf32, #tpu.memory_space<vmem>>, vector<1x4x256xf32>
    tpu.vector_store %arg4[%c0_9, %c0_10, %c0_11], %19 {strides = array<i32>} : memref<1x4x256xf32, #tpu.memory_space<vmem>>, vector<1x4x256xf32>,
    return
  }
  func.func @transform_0(%arg0: i32, %arg1: i32) -> (i32, i32, i32) {
    %c0_i32 = arith.constant 0 : i32
    %c0_i32_0 = arith.constant 0 : i32
    return %arg0, %c0_i32, %arg1 : i32, i32, i32
  }
  func.func @transform_1(%arg0: i32, %arg1: i32) -> (i32, i32, i32) {
    %c0_i32 = arith.constant 0 : i32
    %c0_i32_0 = arith.constant 0 : i32
    %c0_i32_1 = arith.constant 0 : i32
    %c0_i32_2 = arith.constant 0 : i32
    return %c0_i32, %c0_i32_0, %c0_i32_1 : i32, i32, i32
  }
  func.func @transform_2(%arg0: i32, %arg1: i32) -> (i32, i32, i32) {
    %c0_i32 = arith.constant 0 : i32
    %c0_i32_0 = arith.constant 0 : i32
    return %arg0, %c0_i32, %arg1 : i32, i32, i32
  }
}

</mosaic_0001>

<llo_original>
// kernel: tpu_custom_call.1
$region0: #{tpu_custom_call.1}
  #allocation0 [shape = 'u32[]', space=smem, size = 0x4, offset = 0x4, fixed_abs, tag = 'smem constant byte address 0x4 - core index']
  #allocation1 [shape = 'u32[144,128]{1,0:T(1,128)}', space=vmem, size = 0x12000, scoped, tag = 'internal scratch']
  %s0 = inlined_call_operand.hbm [shape: f32[2,4,256], index: 0, kind: input, shape index: {}]
  %s1 = inlined_call_operand.vmem [shape: f32[1,4,1], index: 1, kind: input, shape index: {}]
  %s2 = inlined_call_operand.hbm [shape: f32[2,4,256], index: 2, kind: output, shape index: {}]
  %s3 = sld [smem:[#allocation0]]
  $region45: #{tpu_custom_call.1} parent=0
    _
  %s5 = ssub.s32 1, %s3
  %s6 = scalar_select 0, %s5, %s3
  $region1: #{tpu_custom_call.1} parent=0
    #allocation2 [shape = 'u8[8192]{0}', space=vmem, size = 0x2000, scoped, tag = 'input window, operand 0']
    #allocation3 [shape = 's32[2]{0}', space=sflag, size = 0x8, scoped, tag = 'scoped memory for tpu_custom_call.1']
    #allocation4 [shape = 's32[2]{0}', space=sflag, size = 0x8, scoped, tag = 'scoped memory for tpu_custom_call.1']
    #allocation5 [shape = 'u8[8192]{0}', space=vmem, size = 0x2000, scoped, tag = 'output window, operand 0']
    %7 = vsyncpa [#allocation3], 0
    %s8 = scalar_lea.sflag [#allocation3], 1
    %9 = vsyncpa %s8, 0
    %10 = vsyncpa [#allocation4], 0
    %s11 = scalar_lea.sflag [#allocation4], 1
    %12 = vsyncpa %s11, 0
    loop: start=0, step=1, limit=4
    $region2: #{tpu_custom_call.1} parent=1 // loop_pre_header
      _
    $region3: #{tpu_custom_call.1} parent=1 // loop_header
      %s14 = sphi 0, %s18
      %p15 = scmp.ge.s32.totalorder %s14, 4
      %s21 = sphi 0, %s33
      %s22 = sphi 0, %s29
      %s23 = sphi 0, %s21
      %s24 = sphi 0, %s22
      %s25 = sphi 0, %s23
      %s26 = sphi 0, %s24
      %s38 = sphi 0, %s40
      %s41 = sphi 0, %s38
      %s42 = sphi 0, %s41
      %s58 = sphi 0, %s42
      %s62 = sphi 0, %s62
      %s64 = sphi 0, %s62
      %s65 = sphi 0, %s64
      %s79 = sphi 0, %s65
      %s87 = sphi 0, %s89
      %s90 = sphi 0, %s87
      %s91 = sphi 0, %s90
      %s107 = sphi 0, %s91
    $region4: #{tpu_custom_call.1} parent=1 // loop_header_branch
      %17 = sbr.rel (%p15) target = $region8
    $region5: #{tpu_custom_call.1} parent=1 // loop_body
      %s19 = ssub.s32 %s14, 1
      %s20 = ssub.s32 %s14, 2
      %s27 = sadd.s32 1, %s22
      %p28 = scmp.ge.s32.totalorder %s27, 1
      %s29 = scalar_select %p28, 0, %s27
      %s30 = sadd.s32 1, %s21
      %s31 = scalar_select %p28, %s30, %s21
      %p32 = scmp.ge.s32.totalorder %s31, 2
      %s33 = scalar_select %p32, 0, %s31
      %s34 = ssub.s32 %s21, %s33
      %s35 = ssub.s32 %s22, %s29
      %s36 = sor.u32 %s34, %s35
      %p37 = scmp.eq.s32.totalorder %s36, 0
      %s39 = sadd.s32 %s38, 1
      %s40 = scalar_select %p37, %s38, %s39
      %p43 = pneg %p37
      %p44 = scmp.eq.s32.totalorder %s14, 1
      %p45 = por %p43, %p44
      %p46 = scmp.ne.s32.totalorder %s38, %s41
      %p47 = scmp.eq.s32.totalorder %s14, 0
      %p48 = por %p46, %p47
      %p49 = scmp.ne.s32.totalorder %s38, %s41
      %p50 = scmp.eq.s32.totalorder %s19, 1
      %p51 = por %p49, %p50
      %p52 = scmp.ne.s32.totalorder %s41, %s42
      %p53 = scmp.eq.s32.totalorder %s19, 0
      %p54 = por %p52, %p53
      %p55 = scmp.ne.s32.totalorder %s41, %s42
      %p56 = scmp.eq.s32.totalorder %s20, 1
      %p57 = por %p55, %p56
      %p59 = scmp.ne.s32.totalorder %s42, %s58
      %p60 = scmp.eq.s32.totalorder %s20, 0
      %p61 = por %p59, %p60
      %s63 = sadd.s32 %s62, 1
      %p66 = scmp.eq.s32.totalorder %s14, 1
      %p67 = scmp.ne.s32.totalorder %s62, %s64
      %p68 = scmp.eq.s32.totalorder %s14, 0
      %p69 = por %p67, %p68
      %p70 = scmp.ne.s32.totalorder %s62, %s64
      %p71 = scmp.eq.s32.totalorder %s19, 1
      %p72 = por %p70, %p71
      %p73 = scmp.ne.s32.totalorder %s64, %s65
      %p74 = scmp.eq.s32.totalorder %s19, 0
      %p75 = por %p73, %p74
      %p76 = scmp.ne.s32.totalorder %s64, %s65
      %p77 = scmp.eq.s32.totalorder %s20, 1
      %p78 = por %p76, %p77
      %p80 = scmp.ne.s32.totalorder %s65, %s79
      %p81 = scmp.eq.s32.totalorder %s20, 0
      %p82 = por %p80, %p81
      %s83 = ssub.s32 %s21, %s33
      %s84 = ssub.s32 %s22, %s29
      %s85 = sor.u32 %s83, %s84
      %p86 = scmp.eq.s32.totalorder %s85, 0
      %s88 = sadd.s32 %s87, 1
      %s89 = scalar_select %p86, %s87, %s88
      %p92 = pneg %p86
      %p93 = scmp.eq.s32.totalorder %s14, 1
      %p94 = por %p92, %p93
      %p95 = scmp.ne.s32.totalorder %s87, %s90
      %p96 = scmp.eq.s32.totalorder %s14, 0
      %p97 = por %p95, %p96
      %p98 = scmp.ne.s32.totalorder %s87, %s90
      %p99 = scmp.eq.s32.totalorder %s19, 1
      %p100 = por %p98, %p99
      %p101 = scmp.ne.s32.totalorder %s90, %s91
      %p102 = scmp.eq.s32.totalorder %s19, 0
      %p103 = por %p101, %p102
      %p104 = scmp.ne.s32.totalorder %s90, %s91
      %p105 = scmp.eq.s32.totalorder %s20, 1
      %p106 = por %p104, %p105
      %p108 = scmp.ne.s32.totalorder %s91, %s107
      %p109 = scmp.eq.s32.totalorder %s20, 0
      %p110 = por %p108, %p109
      %p111 = scmp.le.s32.totalorder 1, %s14
      %p112 = scmp.lt.s32.totalorder %s14, 3
      %p113 = pnand %p111, %p112
      %p114 = pneg %p113
      // Predicated region
      $region9: #{tpu_custom_call.1} parent=5 // pred_check
        _
      $region10: #{tpu_custom_call.1} parent=5 // pred_check_branch
        %116 = sbr.rel (%p113) target = $region12
      $region11: #{tpu_custom_call.1} parent=5 // pred_region
        %s117 = ssub.s32 %s14, 1
        // Predicated region
        $region13: #{tpu_custom_call.1} parent=11 // pred_check
          %p118 = pneg %p75
        $region14: #{tpu_custom_call.1} parent=11 // pred_check_branch
          %120 = sbr.rel (%p118) target = $region16
        $region15: #{tpu_custom_call.1} parent=11 // pred_region
          _
        $region16: #{tpu_custom_call.1} parent=11 // pred_fallthru
          _
      $region12: #{tpu_custom_call.1} parent=5 // pred_fallthru
        _
      %p121 = scmp.lt.s32.totalorder %s14, 2
      // Predicated region
      $region17: #{tpu_custom_call.1} parent=5 // pred_check
        %p122 = pneg %p121
      $region18: #{tpu_custom_call.1} parent=5 // pred_check_branch
        %124 = sbr.rel (%p122) target = $region20
      $region19: #{tpu_custom_call.1} parent=5 // pred_region
        // Predicated region
        $region21: #{tpu_custom_call.1} parent=19 // pred_check
          %p125 = pneg %p48
        $region22: #{tpu_custom_call.1} parent=19 // pred_check_branch
          %127 = sbr.rel (%p125) target = $region24
        $region23: #{tpu_custom_call.1} parent=19 // pred_region
          %s128 = sand.u32 %s38, 1
          %s129 = scalar_lea.sflag [#allocation3], %s128
          %s130 = sand.u32 %s38, 1
          %s131 = smul.addr %s130, 8
          %s132 = scalar_lea.vmem [#allocation2], %s131
          %s133 = smul.u32 2, %s22
          %s135 = ssub.s32 128, 128
          %136 = vsyncadd %s129, %s135
          %s137 = smul.addr %s21, 2
          %s138 = sadd.s32 %s133, %s137
          %s139 = smul.addr %s138, 64
          %s140 = scalar_lea.hbm %s0, %s139
          %s142 = sshll.u32 %s132, 4
          %s143 = int_to_ptr.vmem [resolvable:$true] %s142
          %145 = dma.hbm_to_vmem [thread:$0]  %s140, 128, %s143, %s129
        $region24: #{tpu_custom_call.1} parent=19 // pred_fallthru
          _
      $region20: #{tpu_custom_call.1} parent=5 // pred_fallthru
        _
      %p146 = scmp.le.s32.totalorder 1, %s14
      %p147 = scmp.lt.s32.totalorder %s14, 3
      %p148 = pnand %p146, %p147
      %p149 = pneg %p148
      // Predicated region
      $region25: #{tpu_custom_call.1} parent=5 // pred_check
        _
      $region26: #{tpu_custom_call.1} parent=5 // pred_check_branch
        %151 = sbr.rel (%p148) target = $region28
      $region27: #{tpu_custom_call.1} parent=5 // pred_region
        %s152 = ssub.s32 %s14, 1
        %s153 = sand.u32 %s41, 1
        %s154 = scalar_lea.sflag [#allocation3], %s153
        %s155 = sand.u32 %s41, 1
        %s156 = smul.addr %s155, 8
        %s157 = scalar_lea.vmem [#allocation2], %s156
        // Predicated region
        $region29: #{tpu_custom_call.1} parent=27 // pred_check
          %p158 = pneg %p54
        $region30: #{tpu_custom_call.1} parent=27 // pred_check_branch
          %160 = sbr.rel (%p158) target = $region32
        $region31: #{tpu_custom_call.1} parent=27 // pred_region
          %161 = dma.done %s154, 128
        $region32: #{tpu_custom_call.1} parent=27 // pred_fallthru
          _
        %s162 = sand.u32 %s41, 1
        %s163 = scalar_lea.sflag [#allocation3], %s162
        %s164 = sand.u32 %s41, 1
        %s165 = smul.addr %s164, 8
        %s166 = scalar_lea.vmem [#allocation2], %s165
        %p167 = pneg %p54
        %p168 = pneg %p51
        %p169 = pneg %p75
        %p170 = pneg %p72
        %p171 = pneg %p103
        %p172 = pneg %p100
        %s173 = sand.u32 %s90, 1
        %s174 = scalar_lea.sflag [#allocation4], %s173
        %s175 = sand.u32 %s90, 1
        %s176 = smul.addr %s175, 8
        %s177 = scalar_lea.vmem [#allocation5], %s176
        %s178 = smul.u32 2, %s24
        %s179 = smul.u32 2, %s24
        %v180 = vld [vmem:[%s157] sm:$0xff]
        %v181 = vld [vmem:[%s1] sm:$0xf]
        %v183 = vcombine.high %v180, %v180
        %vm185 = vcmask 1043456
        %v186 = vsel %vm185, %v180, 0.0
        %v187 = vrot.slane %v186, 4
        %v188 = vadd.f32 %v186, %v187
        %v189 = vrot.slane %v188, 2
        %v190 = vadd.f32 %v188, %v189
        %v191 = vrot.slane %v190, 1
        %v192 = vadd.f32 %v190, %v191
        %v193 = vsel %vm185, %v183, 0.0
        %v194 = vrot.slane %v193, 4
        %v195 = vadd.f32 %v193, %v194
        %v196 = vrot.slane %v195, 2
        %v197 = vadd.f32 %v195, %v196
        %v198 = vrot.slane %v197, 1
        %v199 = vadd.f32 %v197, %v198
        %v200 = vrcp.pop 4.0
        %v201 = vmul.f32 %v192, %v200
        %v202 = vmul.f32 %v199, %v200
        %v205 = vcombine.low %v201, %v202
        %v207 = vsub.f32 %v180, %v205
        %v208 = vmul.f32 %v207, %v207
        %v210 = vcombine.high %v208, %v208
        %v212 = vsel %vm185, %v208, 0.0
        %v213 = vrot.slane %v212, 4
        %v214 = vadd.f32 %v212, %v213
        %v215 = vrot.slane %v214, 2
        %v216 = vadd.f32 %v214, %v215
        %v217 = vrot.slane %v216, 1
        %v218 = vadd.f32 %v216, %v217
        %v219 = vsel %vm185, %v210, 0.0
        %v220 = vrot.slane %v219, 4
        %v221 = vadd.f32 %v219, %v220
        %v222 = vrot.slane %v221, 2
        %v223 = vadd.f32 %v221, %v222
        %v224 = vrot.slane %v223, 1
        %v225 = vadd.f32 %v223, %v224
        %v226 = vmul.f32 %v218, %v200
        %v227 = vmul.f32 %v225, %v200
        %v228 = vadd.f32 %v226, 1e-05
        %v229 = vadd.f32 %v227, 1e-05
        %v230 = vrsqrt.pop %v228
        %v231 = vrsqrt.pop %v229
        %v234 = vcombine.low %v230, %v231
        %v236 = vmul.f32 %v207, %v234
        %238 = vset.pattern.permute.xlu0 0
        %239 = vperm.xlu0 %238, %v181
        %v240 = vpop.permute.xlu0 %239
        %v242 = vunpack.c.l.s4 839922192
        %v243 = vunpack.c.0.s8 %v242
        %v244 = vlaneseq
        %v245 = vshrl.u32 %v244, 7
        %v246 = vsub.s32 %v243, %v245
        %v247 = vrot.slane %v240, %v246
        %v249 = vmul.f32 %v236, %v247
        %250 = vst [vmem:[%s177] sm:$0xff] %v249
        %s251 = sand.u32 %s90, 1
        %s252 = scalar_lea.sflag [#allocation4], %s251
        %s253 = sand.u32 %s90, 1
        %s254 = smul.addr %s253, 8
        %s255 = scalar_lea.vmem [#allocation5], %s254
        // Predicated region
        $region33: #{tpu_custom_call.1} parent=27 // pred_check
          %p256 = pneg %p100
        $region34: #{tpu_custom_call.1} parent=27 // pred_check_branch
          %258 = sbr.rel (%p256) target = $region36
        $region35: #{tpu_custom_call.1} parent=27 // pred_region
          %s259 = smul.u32 2, %s24
          %s261 = ssub.s32 128, 128
          %262 = vsyncadd %s252, %s261
          %s263 = smul.addr %s23, 2
          %s264 = sadd.s32 %s259, %s263
          %s265 = smul.addr %s264, 64
          %s266 = scalar_lea.hbm %s2, %s265
          %s268 = sshll.u32 %s255, 4
          %s269 = int_to_ptr.vmem [resolvable:$true] %s268
          %271 = dma.vmem_to_hbm [thread:$0]  %s269, 128, %s266, %s252
        $region36: #{tpu_custom_call.1} parent=27 // pred_fallthru
          _
      $region28: #{tpu_custom_call.1} parent=5 // pred_fallthru
        _
      %p272 = scmp.le.s32.totalorder 2, %s14
      // Predicated region
      $region37: #{tpu_custom_call.1} parent=5 // pred_check
        %p273 = pneg %p272
      $region38: #{tpu_custom_call.1} parent=5 // pred_check_branch
        %275 = sbr.rel (%p273) target = $region40
      $region39: #{tpu_custom_call.1} parent=5 // pred_region
        %s276 = ssub.s32 %s14, 2
        // Predicated region
        $region41: #{tpu_custom_call.1} parent=39 // pred_check
          %p277 = pneg %p106
        $region42: #{tpu_custom_call.1} parent=39 // pred_check_branch
          %279 = sbr.rel (%p277) target = $region44
        $region43: #{tpu_custom_call.1} parent=39 // pred_region
          %s280 = sand.u32 %s91, 1
          %s281 = scalar_lea.sflag [#allocation4], %s280
          %s282 = sand.u32 %s91, 1
          %s283 = smul.addr %s282, 8
          %s284 = scalar_lea.vmem [#allocation5], %s283
          %285 = dma.done %s281, 128
        $region44: #{tpu_custom_call.1} parent=39 // pred_fallthru
          _
      $region40: #{tpu_custom_call.1} parent=5 // pred_fallthru
        _
    $region6: #{tpu_custom_call.1} parent=1 // loop_footer
      %s18 = sadd.s32 1, %s14
    $region7: #{tpu_custom_call.1} parent=1 // loop_footer_branch
      %13 = sbr.rel target = $region3
    $region8: #{tpu_custom_call.1} parent=1 // loop_exit
      _
    %286 = vsyncpa [#allocation3], 1
    %s287 = scalar_lea.sflag [#allocation3], 1
    %288 = vsyncpa %s287, 1
    %289 = vsyncpa [#allocation4], 1
    %s290 = scalar_lea.sflag [#allocation4], 1
    %291 = vsyncpa %s290, 1

</llo_original>
